<compile_context>
chip_gen: v7x
topology: tpu7x:2x2x1
jax: 0.10.0
libtpu: 0.0.40
codegen_flags: <defaults>
</compile_context>

<pallas_src>
import functools

import jax
import jax.numpy as jnp
from jax import lax
from jax.experimental import pallas as pl
from jax.experimental.pallas import tpu as pltpu

# Synthetic "config" (the torch module reads these off a ConfigHelper).
USE_DRQ = True
DRQ_IMAGE_PAD = 4
DRQ_RAY_PAD = 4
RAY_LEN = 802


# ----------------------------- image (4-D) path -----------------------------
def _image_shift_kernel(shift_ref, x_ref, o_ref, rpad_ref, cpad_ref, *,
                        block_n, n_total, pad, chans):
    """One grid step = `block_n` samples; replicate padding fused in VMEM.

    shift_ref : SMEM (2*N,) int32 scalar prefetch: [0:N]=sx (col), [N:2N]=sy (row)
    x_ref     : VMEM (block_n, H, W*C)  unpadded, lane-dense input block
    o_ref     : VMEM (block_n, H, W*C)  output block
    rpad_ref  : VMEM (H + 2*pad, W*C)   per-sample row-padded scratch
    cpad_ref  : VMEM (H, (W + 2*pad)*C) per-sample column-padded scratch
    """
    blk = pl.program_id(0)
    H = o_ref.shape[1]
    WC = o_ref.shape[2]
    C = chans
    W = WC // C

    def body(j, carry):
        # Global sample index, clamped: the ragged last block may run past N;
        # those iterations read a valid shift and write rows of the output
        # block that the truncated write-back DMA discards.
        i = jnp.minimum(blk * block_n + j, n_total - 1)
        sx = shift_ref[i]                # column shift in [0, 2*pad]
        sy = shift_ref[n_total + i]      # row shift    in [0, 2*pad]

        v = x_ref[j]                     # (H, WC)

        # -- rows: rebuild the replicate-padded rows in VMEM scratch, then the
        #    row shift is a dynamic sublane window (start sy, length H).
        rpad_ref[pl.ds(0, pad), :] = jnp.broadcast_to(v[:1, :], (pad, WC))
        rpad_ref[pl.ds(pad, H), :] = v
        rpad_ref[pl.ds(pad + H, pad), :] = jnp.broadcast_to(v[H - 1:, :], (pad, WC))
        rows = rpad_ref[pl.ds(sy, H), :]                        # (H, WC)

        # -- columns: rebuild the replicate-padded columns (pixel groups of C
        #    lanes), then select among the 2*pad+1 static lane crops.  The
        #    selects are VPU filler in a DMA-bound kernel.
        cpad_ref[:, pl.ds(pad * C, WC)] = rows
        for k in range(pad):
            cpad_ref[:, pl.ds(k * C, C)] = rows[:, :C]                   # left edge
            cpad_ref[:, pl.ds((pad + W + k) * C, C)] = rows[:, WC - C:]  # right edge
        cp = cpad_ref[...]                                      # (H, (W+2*pad)*C)
        res = cp[:, 0:WC]
        for k in range(1, 2 * pad + 1):
            res = jnp.where(sx == k, cp[:, k * C:k * C + WC], res)
        # TODO(synk): on v7x (3.2 TB/s/TC) this 2*pad-way select chain can
        # become the binding slot for large images; a binary select tree or a
        # dynamic lane crop would trim it further.

        o_ref[j] = res
        return carry

    lax.fori_loop(0, block_n, body, 0)


def _pick_block_n(n, per_sample_bytes, target_block_bytes):
    """Samples per grid step.

    Largest block under the VMEM byte target; when the whole batch would fit
    in a single step, split it in two so both TensorCores of a 2-TC chip (v7x)
    get work (costs one extra ~0.35 us pipeline step on 1-TC v5e/v6e).
    """
    nb = max(1, min(n, target_block_bytes // max(1, per_sample_bytes)))
    if n >= 2 and pl.cdiv(n, nb) < 2:
        nb = pl.cdiv(n, 2)
    return int(nb)


def random_shift_image(x, shifts, pad=DRQ_IMAGE_PAD):
    """x: (N, H, W, C) NHWC; shifts: (N, 2) int32 in [0, 2*pad].

    out[n, r, c, :] = edge_pad(x)[n, r + sy_n, c + sx_n, :]  (exact crop).
    The replicate padding is fused into the kernel, so HBM traffic is
    read(x) + write(out) ~= 2x the image bytes (vs ~6.5x with an XLA pad).
    """
    n, h, w, c = x.shape
    assert h == w
    if pad == 0:
        return x

    x3 = x.reshape(n, h, w * c)                     # lane-dense (free reshape)
    per_sample_bytes = h * w * c * x.dtype.itemsize

    # Block sizing: ~6 MiB input blocks -> ~24 MiB double-buffered (in + out),
    # inside v7x's 32 MiB scoped default / 64 MiB VMEM; grow to ~12 MiB on
    # 128 MiB parts (v5e/v6e).
    try:
        vmem_cap = int(getattr(pltpu.get_tpu_info(), "vmem_capacity_bytes"))
    except Exception:
        vmem_cap = 64 << 20
    target_block_bytes = (6 << 20) if vmem_cap <= (64 << 20) else (12 << 20)

    nb = _pick_block_n(n, per_sample_bytes, target_block_bytes)
    grid = (pl.cdiv(n, nb),)

    block_bytes = nb * per_sample_bytes
    vmem_limit = int(min(max(4 * block_bytes + (2 << 20), 16 << 20),
                         (vmem_cap * 3) // 4))

    # Flat (2N,) int32 scalar prefetch: [0:N]=sx, [N:2N]=sy.  (An (N, 2) SMEM
    # array would pad to [ceil(N/8)*8, 128] words, ~512*N bytes.)
    shifts_flat = jnp.concatenate([shifts[:, 0], shifts[:, 1]]).astype(jnp.int32)

    kernel = functools.partial(_image_shift_kernel, block_n=nb, n_total=n,
                               pad=pad, chans=c)
    out = pl.pallas_call(
        kernel,
        out_shape=jax.ShapeDtypeStruct((n, h, w * c), x.dtype),
        grid_spec=pltpu.PrefetchScalarGridSpec(
            num_scalar_prefetch=1,
            grid=grid,
            in_specs=[pl.BlockSpec((nb, h, w * c), lambda b, s: (b, 0, 0))],
            out_specs=pl.BlockSpec((nb, h, w * c), lambda b, s: (b, 0, 0)),
            scratch_shapes=[
                pltpu.VMEM((h + 2 * pad, w * c), x.dtype),
                pltpu.VMEM((h, (w + 2 * pad) * c), x.dtype),
            ],
        ),
        compiler_params=pltpu.CompilerParams(
            dimension_semantics=("parallel",),
            vmem_limit_bytes=vmem_limit),
    )(shifts_flat, x3)
    return out.reshape(n, h, w, c)


# ------------------------------ ray (2-D) path -------------------------------
def random_shift_ray(x, shift, pad=DRQ_RAY_PAD):
    """x: (B, 802), shift: scalar int32 in [-pad, pad].

    Per the perf review this branch moves ~6.5 KB; a pallas_call's fixed cost
    dwarfs the work, so it stays a plain dynamic_slice of the edge-padded
    array (roll-then-crop never wraps => pure window select) that XLA fuses.
    """
    _, L = x.shape
    xpad = jnp.pad(x, ((0, 0), (pad, pad)), mode="edge")
    return lax.dynamic_slice_in_dim(xpad, pad - shift, L, axis=1)


# ------------------------------- module wrapper ------------------------------
class RandomShiftsAug:
    def __init__(self, use_drq=USE_DRQ, drq_image_pad=DRQ_IMAGE_PAD,
                 drq_ray_pad=DRQ_RAY_PAD):
        self.use_drq = use_drq
        self.drq_image_pad = drq_image_pad
        self.drq_ray_pad = drq_ray_pad

    def __call__(self, x, key):
        if not self.use_drq:
            return x
        if x.ndim == 4:
            # torch: randint(0, 2*pad+1, (n,1,1,2)); here drawn with JAX RNG.
            n = x.shape[0]
            shifts = jax.random.randint(
                key, (n, 2), 0, 2 * self.drq_image_pad + 1, dtype=jnp.int32)
            return random_shift_image(x, shifts, self.drq_image_pad)
        elif x.ndim == 2 and x.shape[-1] == RAY_LEN:
            shift = jax.random.randint(
                key, (), -self.drq_ray_pad, self.drq_ray_pad + 1, dtype=jnp.int32)
            return random_shift_ray(x, shift, self.drq_ray_pad)
        else:
            return x


if __name__ == "__main__":
    key = jax.random.PRNGKey(0)
    k_img, k_ray, k_simg, k_sray, k_img2, k_simg2 = jax.random.split(key, 6)

    aug = RandomShiftsAug()

    def ref_image(x, shifts, pad):
        xpad = jnp.pad(x, ((0, 0), (pad, pad), (pad, pad), (0, 0)), mode="edge")
        return jnp.stack([
            lax.dynamic_slice(xpad[i], (shifts[i, 1], shifts[i, 0], 0),
                              x.shape[1:])
            for i in range(x.shape[0])
        ])

    # ---- image branch: NHWC, N=2, H=W=16, C=4 ----
    x_img = jax.random.normal(k_img, (2, 16, 16, 4), dtype=jnp.float32)
    y_img = aug(x_img, k_simg)
    jax.block_until_ready(y_img)
    assert y_img.shape == x_img.shape and y_img.dtype == x_img.dtype
    shifts = jax.random.randint(k_simg, (2, 2), 0, 2 * DRQ_IMAGE_PAD + 1,
                                dtype=jnp.int32)
    assert jnp.array_equal(y_img, ref_image(x_img, shifts, DRQ_IMAGE_PAD))

    # ---- image branch, ragged batch (N=5 -> cdiv grid + clamped last block) ----
    x_img2 = jax.random.normal(k_img2, (5, 16, 16, 4), dtype=jnp.float32)
    y_img2 = aug(x_img2, k_simg2)
    jax.block_until_ready(y_img2)
    shifts2 = jax.random.randint(k_simg2, (5, 2), 0, 2 * DRQ_IMAGE_PAD + 1,
                                 dtype=jnp.int32)
    assert jnp.array_equal(y_img2, ref_image(x_img2, shifts2, DRQ_IMAGE_PAD))

    # ---- ray branch: (B, 802) ----
    x_ray = jax.random.normal(k_ray, (2, RAY_LEN), dtype=jnp.float32)
    y_ray = aug(x_ray, k_sray)
    jax.block_until_ready(y_ray)
    shift = jax.random.randint(k_sray, (), -DRQ_RAY_PAD, DRQ_RAY_PAD + 1,
                               dtype=jnp.int32)
    xpad_r = jnp.pad(x_ray, ((0, 0), (DRQ_RAY_PAD,) * 2), mode="edge")
    ref_ray = lax.dynamic_slice(xpad_r, (0, DRQ_RAY_PAD - shift), (2, RAY_LEN))
    assert jnp.array_equal(y_ray, ref_ray)

    print("KERNEL_OK")
</pallas_src>

<mosaic_0001>
module attributes {stable_mosaic.version = 11 : i64} {
  func.func @_image_shift_kernel(%arg0: i32, %arg1: memref<4xi32, #tpu.memory_space<smem>>, %arg2: memref<1x16x64xf32, #tpu.memory_space<vmem>>, %arg3: memref<1x16x64xf32, #tpu.memory_space<vmem>>, %arg4: memref<24x64xf32, #tpu.memory_space<vmem>>, %arg5: memref<16x96xf32, #tpu.memory_space<vmem>>) attributes {dimension_semantics = [#tpu.dimension_semantics<parallel>], iteration_bounds = array<i64: 2>, scalar_prefetch = 1 : i64, scratch_operands = 2 : i64, tpu.core_type = #tpu.core_type<tc>, window_params = [{transform_indices = @transform_0, window_bounds = array<i64: 1, 16, 64>}, {transform_indices = @transform_1, window_bounds = array<i64: 1, 16, 64>}]} {
    %c0_i32 = arith.constant 0 : i32
    %c1_i32 = arith.constant 1 : i32
    %0 = arith.muli %arg0, %c1_i32 : i32
    %1 = arith.addi %0, %c0_i32 : i32
    %c1_i32_0 = arith.constant 1 : i32
    %2 = arith.minsi %1, %c1_i32_0 : i32
    %3 = arith.index_cast %2 : i32 to index
    %4 = memref.load %arg1[%3] : memref<4xi32, #tpu.memory_space<smem>>
    %c2_i32 = arith.constant 2 : i32
    %5 = arith.addi %c2_i32, %2 : i32
    %6 = arith.index_cast %5 : i32 to index
    %7 = memref.load %arg1[%6] : memref<4xi32, #tpu.memory_space<smem>>
    %8 = arith.index_cast %c0_i32 : i32 to index
    %c0 = arith.constant 0 : index
    %c0_1 = arith.constant 0 : index
    %9 = vector.load %arg2[%8, %c0, %c0_1] : memref<1x16x64xf32, #tpu.memory_space<vmem>>, vector<1x16x64xf32>
    %10 = vector.shape_cast %9 : vector<1x16x64xf32> to vector<16x64xf32>
    %11 = vector.extract_strided_slice %10 {offsets = [0, 0], sizes = [1, 64], strides = [1, 1]} : vector<16x64xf32> to vector<1x64xf32>
    %12 = vector.shape_cast %11 : vector<1x64xf32> to vector<1x64xf32>
    %13 = vector.broadcast %12 : vector<1x64xf32> to vector<4x64xf32>
    %c0_2 = arith.constant 0 : index
    %c0_3 = arith.constant 0 : index
    %14 = vector.load %arg4[%c0_2, %c0_3] : memref<24x64xf32, #tpu.memory_space<vmem>>, vector<4x64xf32>
    tpu.vector_store %arg4[%c0_2, %c0_3], %13 {strides = array<i32>} : memref<24x64xf32, #tpu.memory_space<vmem>>, vector<4x64xf32>,
    %c4 = arith.constant 4 : index
    %c0_4 = arith.constant 0 : index
    %15 = vector.load %arg4[%c4, %c0_4] : memref<24x64xf32, #tpu.memory_space<vmem>>, vector<16x64xf32>
    tpu.vector_store %arg4[%c4, %c0_4], %10 {strides = array<i32>} : memref<24x64xf32, #tpu.memory_space<vmem>>, vector<16x64xf32>,
    %16 = vector.extract_strided_slice %10 {offsets = [15, 0], sizes = [1, 64], strides = [1, 1]} : vector<16x64xf32> to vector<1x64xf32>
    %17 = vector.shape_cast %16 : vector<1x64xf32> to vector<1x64xf32>
    %18 = vector.broadcast %17 : vector<1x64xf32> to vector<4x64xf32>
    %c20 = arith.constant 20 : index
    %c0_5 = arith.constant 0 : index
    %19 = vector.load %arg4[%c20, %c0_5] : memref<24x64xf32, #tpu.memory_space<vmem>>, vector<4x64xf32>
    tpu.vector_store %arg4[%c20, %c0_5], %18 {strides = array<i32>} : memref<24x64xf32, #tpu.memory_space<vmem>>, vector<4x64xf32>,
    %20 = arith.index_cast %7 : i32 to index
    %c0_6 = arith.constant 0 : index
    %21 = vector.load %arg4[%20, %c0_6] : memref<24x64xf32, #tpu.memory_space<vmem>>, vector<16x64xf32>
    %c0_7 = arith.constant 0 : index
    %c16 = arith.constant 16 : index
    %22 = vector.load %arg5[%c0_7, %c16] : memref<16x96xf32, #tpu.memory_space<vmem>>, vector<16x64xf32>
    tpu.vector_store %arg5[%c0_7, %c16], %21 {strides = array<i32>} : memref<16x96xf32, #tpu.memory_space<vmem>>, vector<16x64xf32>,
    %23 = vector.extract_strided_slice %21 {offsets = [0, 0], sizes = [16, 4], strides = [1, 1]} : vector<16x64xf32> to vector<16x4xf32>
    %c0_8 = arith.constant 0 : index
    %c0_9 = arith.constant 0 : index
    %24 = vector.load %arg5[%c0_8, %c0_9] : memref<16x96xf32, #tpu.memory_space<vmem>>, vector<16x4xf32>
    tpu.vector_store %arg5[%c0_8, %c0_9], %23 {strides = array<i32>} : memref<16x96xf32, #tpu.memory_space<vmem>>, vector<16x4xf32>,
    %25 = vector.extract_strided_slice %21 {offsets = [0, 60], sizes = [16, 4], strides = [1, 1]} : vector<16x64xf32> to vector<16x4xf32>
    %c0_10 = arith.constant 0 : index
    %c80 = arith.constant 80 : index
    %26 = vector.load %arg5[%c0_10, %c80] : memref<16x96xf32, #tpu.memory_space<vmem>>, vector<16x4xf32>
    tpu.vector_store %arg5[%c0_10, %c80], %25 {strides = array<i32>} : memref<16x96xf32, #tpu.memory_space<vmem>>, vector<16x4xf32>,
    %27 = vector.extract_strided_slice %21 {offsets = [0, 0], sizes = [16, 4], strides = [1, 1]} : vector<16x64xf32> to vector<16x4xf32>
    %c0_11 = arith.constant 0 : index
    %c4_12 = arith.constant 4 : index
    %28 = vector.load %arg5[%c0_11, %c4_12] : memref<16x96xf32, #tpu.memory_space<vmem>>, vector<16x4xf32>
    tpu.vector_store %arg5[%c0_11, %c4_12], %27 {strides = array<i32>} : memref<16x96xf32, #tpu.memory_space<vmem>>, vector<16x4xf32>,
    %29 = vector.extract_strided_slice %21 {offsets = [0, 60], sizes = [16, 4], strides = [1, 1]} : vector<16x64xf32> to vector<16x4xf32>
    %c0_13 = arith.constant 0 : index
    %c84 = arith.constant 84 : index
    %30 = vector.load %arg5[%c0_13, %c84] : memref<16x96xf32, #tpu.memory_space<vmem>>, vector<16x4xf32>
    tpu.vector_store %arg5[%c0_13, %c84], %29 {strides = array<i32>} : memref<16x96xf32, #tpu.memory_space<vmem>>, vector<16x4xf32>,
    %31 = vector.extract_strided_slice %21 {offsets = [0, 0], sizes = [16, 4], strides = [1, 1]} : vector<16x64xf32> to vector<16x4xf32>
    %c0_14 = arith.constant 0 : index
    %c8 = arith.constant 8 : index
    %32 = vector.load %arg5[%c0_14, %c8] : memref<16x96xf32, #tpu.memory_space<vmem>>, vector<16x4xf32>
    tpu.vector_store %arg5[%c0_14, %c8], %31 {strides = array<i32>} : memref<16x96xf32, #tpu.memory_space<vmem>>, vector<16x4xf32>,
    %33 = vector.extract_strided_slice %21 {offsets = [0, 60], sizes = [16, 4], strides = [1, 1]} : vector<16x64xf32> to vector<16x4xf32>
    %c0_15 = arith.constant 0 : index
    %c88 = arith.constant 88 : index
    %34 = vector.load %arg5[%c0_15, %c88] : memref<16x96xf32, #tpu.memory_space<vmem>>, vector<16x4xf32>
    tpu.vector_store %arg5[%c0_15, %c88], %33 {strides = array<i32>} : memref<16x96xf32, #tpu.memory_space<vmem>>, vector<16x4xf32>,
    %35 = vector.extract_strided_slice %21 {offsets = [0, 0], sizes = [16, 4], strides = [1, 1]} : vector<16x64xf32> to vector<16x4xf32>
    %c0_16 = arith.constant 0 : index
    %c12 = arith.constant 12 : index
    %36 = vector.load %arg5[%c0_16, %c12] : memref<16x96xf32, #tpu.memory_space<vmem>>, vector<16x4xf32>
    tpu.vector_store %arg5[%c0_16, %c12], %35 {strides = array<i32>} : memref<16x96xf32, #tpu.memory_space<vmem>>, vector<16x4xf32>,
    %37 = vector.extract_strided_slice %21 {offsets = [0, 60], sizes = [16, 4], strides = [1, 1]} : vector<16x64xf32> to vector<16x4xf32>
    %c0_17 = arith.constant 0 : index
    %c92 = arith.constant 92 : index
    %38 = vector.load %arg5[%c0_17, %c92] : memref<16x96xf32, #tpu.memory_space<vmem>>, vector<16x4xf32>
    tpu.vector_store %arg5[%c0_17, %c92], %37 {strides = array<i32>} : memref<16x96xf32, #tpu.memory_space<vmem>>, vector<16x4xf32>,
    %c0_18 = arith.constant 0 : index
    %c0_19 = arith.constant 0 : index
    %39 = vector.load %arg5[%c0_18, %c0_19] : memref<16x96xf32, #tpu.memory_space<vmem>>, vector<16x96xf32>
    %40 = vector.extract_strided_slice %39 {offsets = [0, 0], sizes = [16, 64], strides = [1, 1]} : vector<16x96xf32> to vector<16x64xf32>
    %c1_i32_20 = arith.constant 1 : i32
    %41 = arith.cmpi eq, %4, %c1_i32_20 : i32
    %42 = vector.extract_strided_slice %39 {offsets = [0, 4], sizes = [16, 64], strides = [1, 1]} : vector<16x96xf32> to vector<16x64xf32>
    %43 = arith.select %41, %42, %40 : vector<16x64xf32>
    %c2_i32_21 = arith.constant 2 : i32
    %44 = arith.cmpi eq, %4, %c2_i32_21 : i32
    %45 = vector.extract_strided_slice %39 {offsets = [0, 8], sizes = [16, 64], strides = [1, 1]} : vector<16x96xf32> to vector<16x64xf32>
    %46 = arith.select %44, %45, %43 : vector<16x64xf32>
    %c3_i32 = arith.constant 3 : i32
    %47 = arith.cmpi eq, %4, %c3_i32 : i32
    %48 = vector.extract_strided_slice %39 {offsets = [0, 12], sizes = [16, 64], strides = [1, 1]} : vector<16x96xf32> to vector<16x64xf32>
    %49 = arith.select %47, %48, %46 : vector<16x64xf32>
    %c4_i32 = arith.constant 4 : i32
    %50 = arith.cmpi eq, %4, %c4_i32 : i32
    %51 = vector.extract_strided_slice %39 {offsets = [0, 16], sizes = [16, 64], strides = [1, 1]} : vector<16x96xf32> to vector<16x64xf32>
    %52 = arith.select %50, %51, %49 : vector<16x64xf32>
    %c5_i32 = arith.constant 5 : i32
    %53 = arith.cmpi eq, %4, %c5_i32 : i32
    %54 = vector.extract_strided_slice %39 {offsets = [0, 20], sizes = [16, 64], strides = [1, 1]} : vector<16x96xf32> to vector<16x64xf32>
    %55 = arith.select %53, %54, %52 : vector<16x64xf32>
    %c6_i32 = arith.constant 6 : i32
    %56 = arith.cmpi eq, %4, %c6_i32 : i32
    %57 = vector.extract_strided_slice %39 {offsets = [0, 24], sizes = [16, 64], strides = [1, 1]} : vector<16x96xf32> to vector<16x64xf32>
    %58 = arith.select %56, %57, %55 : vector<16x64xf32>
    %c7_i32 = arith.constant 7 : i32
    %59 = arith.cmpi eq, %4, %c7_i32 : i32
    %60 = vector.extract_strided_slice %39 {offsets = [0, 28], sizes = [16, 64], strides = [1, 1]} : vector<16x96xf32> to vector<16x64xf32>
    %61 = arith.select %59, %60, %58 : vector<16x64xf32>
    %c8_i32 = arith.constant 8 : i32
    %62 = arith.cmpi eq, %4, %c8_i32 : i32
    %63 = vector.extract_strided_slice %39 {offsets = [0, 32], sizes = [16, 64], strides = [1, 1]} : vector<16x96xf32> to vector<16x64xf32>
    %64 = arith.select %62, %63, %61 : vector<16x64xf32>
    %65 = arith.index_cast %c0_i32 : i32 to index
    %c0_22 = arith.constant 0 : index
    %c0_23 = arith.constant 0 : index
    %66 = vector.load %arg3[%65, %c0_22, %c0_23] : memref<1x16x64xf32, #tpu.memory_space<vmem>>, vector<1x16x64xf32>
    %67 = vector.shape_cast %66 : vector<1x16x64xf32> to vector<16x64xf32>
    %68 = vector.shape_cast %64 : vector<16x64xf32> to vector<1x16x64xf32>
    tpu.vector_store %arg3[%65, %c0_22, %c0_23], %68 {strides = array<i32>} : memref<1x16x64xf32, #tpu.memory_space<vmem>>, vector<1x16x64xf32>,
    %c1_i32_24 = arith.constant 1 : i32
    return
  }
  func.func @transform_0(%arg0: i32, %arg1: memref<4xi32, #tpu.memory_space<smem>>) -> (i32, i32, i32) {
    %c0_i32 = arith.constant 0 : i32
    %c0_i32_0 = arith.constant 0 : i32
    %c0_i32_1 = arith.constant 0 : i32
    return %arg0, %c0_i32, %c0_i32_0 : i32, i32, i32
  }
  func.func @transform_1(%arg0: i32, %arg1: memref<4xi32, #tpu.memory_space<smem>>) -> (i32, i32, i32) {
    %c0_i32 = arith.constant 0 : i32
    %c0_i32_0 = arith.constant 0 : i32
    %c0_i32_1 = arith.constant 0 : i32
    return %arg0, %c0_i32, %c0_i32_0 : i32, i32, i32
  }
}

</mosaic_0001>

<llo_original>
// kernel: tpu_custom_call.1
$region0: #{tpu_custom_call.1}
  #allocation0 [shape = 'u32[]', space=smem, size = 0x4, offset = 0x4, fixed_abs, tag = 'smem constant byte address 0x4 - core index']
  #allocation1 [shape = 'u32[144,128]{1,0:T(1,128)}', space=vmem, size = 0x12000, scoped, tag = 'internal scratch']
  #allocation2 [shape = 'f32[24,64]{1,0:T(8,128)}', space=vmem, size = 0x3000, scoped, tag = 'scratch operand']
  #allocation3 [shape = 'f32[16,96]{1,0:T(8,128)}', space=vmem, size = 0x2000, scoped, tag = 'scratch operand']
  #allocation4 [shape = 's32[1]{0}', space=sflag, size = 0x4, scoped, tag = 'scoped memory for tpu_custom_call.1']
  #allocation5 [shape = 'u8[512]{0}', space=smem, size = 0x200, scoped, tag = 'prefetched SMEM operand 0']
  %s0 = inlined_call_operand.hbm [shape: s32[4], index: 0, kind: input, shape index: {}]
  %s1 = inlined_call_operand.hbm [shape: f32[2,16,64], index: 1, kind: input, shape index: {}]
  %s2 = inlined_call_operand.hbm [shape: f32[2,16,64], index: 2, kind: output, shape index: {}]
  %s3 = sld [smem:[#allocation0]]
  $region41: #{tpu_custom_call.1} parent=0
    _
  %s5 = ssub.s32 1, %s3
  %s6 = scalar_select 0, %s5, %s3
  %8 = dma.hbm_to_smem %s0, 16, [#allocation5], [#allocation4]
  %9 = dma.done [#allocation4], 16
  %10 = sfence
  $region1: #{tpu_custom_call.1} parent=0
    #allocation6 [shape = 'u8[16384]{0}', space=vmem, size = 0x4000, scoped, tag = 'input window, operand 1']
    #allocation7 [shape = 's32[2]{0}', space=sflag, size = 0x8, scoped, tag = 'scoped memory for tpu_custom_call.1']
    #allocation8 [shape = 's32[2]{0}', space=sflag, size = 0x8, scoped, tag = 'scoped memory for tpu_custom_call.1']
    #allocation9 [shape = 'u8[16384]{0}', space=vmem, size = 0x4000, scoped, tag = 'output window, operand 0']
    %11 = vsyncpa [#allocation7], 0
    %s12 = scalar_lea.sflag [#allocation7], 1
    %13 = vsyncpa %s12, 0
    %14 = vsyncpa [#allocation8], 0
    %s15 = scalar_lea.sflag [#allocation8], 1
    %16 = vsyncpa %s15, 0
    loop: start=0, step=1, limit=4
    $region2: #{tpu_custom_call.1} parent=1 // loop_pre_header
      _
    $region3: #{tpu_custom_call.1} parent=1 // loop_header
      %s18 = sphi 0, %s22
      %p19 = scmp.ge.s32.totalorder %s18, 4
      %s28 = sphi 0, %s30
      %s31 = sphi 0, %s28
      %s32 = sphi 0, %s31
      %s48 = sphi 0, %s32
      %s54 = sphi 0, %s56
      %s57 = sphi 0, %s54
      %s58 = sphi 0, %s57
      %s74 = sphi 0, %s58
    $region4: #{tpu_custom_call.1} parent=1 // loop_header_branch
      %21 = sbr.rel (%p19) target = $region8
    $region5: #{tpu_custom_call.1} parent=1 // loop_body
      %s23 = ssub.s32 %s18, 1
      %s24 = ssub.s32 %s18, 2
      %s25 = sadd.s32 %s18, 1
      %s26 = ssub.s32 %s18, %s25
      %p27 = scmp.eq.s32.totalorder %s26, 0
      %s29 = sadd.s32 %s28, 1
      %s30 = scalar_select %p27, %s28, %s29
      %p33 = pneg %p27
      %p34 = scmp.eq.s32.totalorder %s18, 1
      %p35 = por %p33, %p34
      %p36 = scmp.ne.s32.totalorder %s28, %s31
      %p37 = scmp.eq.s32.totalorder %s18, 0
      %p38 = por %p36, %p37
      %p39 = scmp.ne.s32.totalorder %s28, %s31
      %p40 = scmp.eq.s32.totalorder %s23, 1
      %p41 = por %p39, %p40
      %p42 = scmp.ne.s32.totalorder %s31, %s32
      %p43 = scmp.eq.s32.totalorder %s23, 0
      %p44 = por %p42, %p43
      %p45 = scmp.ne.s32.totalorder %s31, %s32
      %p46 = scmp.eq.s32.totalorder %s24, 1
      %p47 = por %p45, %p46
      %p49 = scmp.ne.s32.totalorder %s32, %s48
      %p50 = scmp.eq.s32.totalorder %s24, 0
      %p51 = por %p49, %p50
      %s52 = ssub.s32 %s18, %s25
      %p53 = scmp.eq.s32.totalorder %s52, 0
      %s55 = sadd.s32 %s54, 1
      %s56 = scalar_select %p53, %s54, %s55
      %p59 = pneg %p53
      %p60 = scmp.eq.s32.totalorder %s18, 1
      %p61 = por %p59, %p60
      %p62 = scmp.ne.s32.totalorder %s54, %s57
      %p63 = scmp.eq.s32.totalorder %s18, 0
      %p64 = por %p62, %p63
      %p65 = scmp.ne.s32.totalorder %s54, %s57
      %p66 = scmp.eq.s32.totalorder %s23, 1
      %p67 = por %p65, %p66
      %p68 = scmp.ne.s32.totalorder %s57, %s58
      %p69 = scmp.eq.s32.totalorder %s23, 0
      %p70 = por %p68, %p69
      %p71 = scmp.ne.s32.totalorder %s57, %s58
      %p72 = scmp.eq.s32.totalorder %s24, 1
      %p73 = por %p71, %p72
      %p75 = scmp.ne.s32.totalorder %s58, %s74
      %p76 = scmp.eq.s32.totalorder %s24, 0
      %p77 = por %p75, %p76
      %p78 = scmp.le.s32.totalorder 1, %s18
      %p79 = scmp.lt.s32.totalorder %s18, 3
      %p80 = pnand %p78, %p79
      %p81 = pneg %p80
      // Predicated region
      $region9: #{tpu_custom_call.1} parent=5 // pred_check
        _
      $region10: #{tpu_custom_call.1} parent=5 // pred_check_branch
        %83 = sbr.rel (%p80) target = $region12
      $region11: #{tpu_custom_call.1} parent=5 // pred_region
        %s84 = ssub.s32 %s18, 1
      $region12: #{tpu_custom_call.1} parent=5 // pred_fallthru
        _
      %p85 = scmp.lt.s32.totalorder %s18, 2
      // Predicated region
      $region13: #{tpu_custom_call.1} parent=5 // pred_check
        %p86 = pneg %p85
      $region14: #{tpu_custom_call.1} parent=5 // pred_check_branch
        %88 = sbr.rel (%p86) target = $region16
      $region15: #{tpu_custom_call.1} parent=5 // pred_region
        // Predicated region
        $region17: #{tpu_custom_call.1} parent=15 // pred_check
          %p89 = pneg %p38
        $region18: #{tpu_custom_call.1} parent=15 // pred_check_branch
          %91 = sbr.rel (%p89) target = $region20
        $region19: #{tpu_custom_call.1} parent=15 // pred_region
          %s92 = sand.u32 %s28, 1
          %s93 = scalar_lea.sflag [#allocation7], %s92
          %s94 = sand.u32 %s28, 1
          %s95 = smul.addr %s94, 16
          %s96 = scalar_lea.vmem [#allocation6], %s95
          %s98 = ssub.s32 256, 256
          %99 = vsyncadd %s93, %s98
          %s100 = smul.addr %s18, 2
          %s101 = smul.addr %s100, 128
          %s102 = scalar_lea.hbm %s1, %s101
          %s103 = sshll.u32 %s96, 4
          %s104 = int_to_ptr.vmem [resolvable:$true] %s103
          %109 = dma.hbm_to_vmem [thread:$0]  %s102, 256, %s104, %s93, 128, 128, 8
        $region20: #{tpu_custom_call.1} parent=15 // pred_fallthru
          _
      $region16: #{tpu_custom_call.1} parent=5 // pred_fallthru
        _
      %p110 = scmp.le.s32.totalorder 1, %s18
      %p111 = scmp.lt.s32.totalorder %s18, 3
      %p112 = pnand %p110, %p111
      %p113 = pneg %p112
      // Predicated region
      $region21: #{tpu_custom_call.1} parent=5 // pred_check
        _
      $region22: #{tpu_custom_call.1} parent=5 // pred_check_branch
        %115 = sbr.rel (%p112) target = $region24
      $region23: #{tpu_custom_call.1} parent=5 // pred_region
        %s116 = ssub.s32 %s18, 1
        %s117 = sand.u32 %s31, 1
        %s118 = scalar_lea.sflag [#allocation7], %s117
        %s119 = sand.u32 %s31, 1
        %s120 = smul.addr %s119, 16
        %s121 = scalar_lea.vmem [#allocation6], %s120
        // Predicated region
        $region25: #{tpu_custom_call.1} parent=23 // pred_check
          %p122 = pneg %p44
        $region26: #{tpu_custom_call.1} parent=23 // pred_check_branch
          %124 = sbr.rel (%p122) target = $region28
        $region27: #{tpu_custom_call.1} parent=23 // pred_region
          %125 = dma.done %s118, 256
        $region28: #{tpu_custom_call.1} parent=23 // pred_fallthru
          _
        %s126 = sand.u32 %s31, 1
        %s127 = scalar_lea.sflag [#allocation7], %s126
        %s128 = sand.u32 %s31, 1
        %s129 = smul.addr %s128, 16
        %s130 = scalar_lea.vmem [#allocation6], %s129
        %p131 = pneg %p44
        %p132 = pneg %p41
        %p133 = pneg %p70
        %p134 = pneg %p67
        %s135 = sand.u32 %s57, 1
        %s136 = scalar_lea.sflag [#allocation8], %s135
        %s137 = sand.u32 %s57, 1
        %s138 = smul.addr %s137, 16
        %s139 = scalar_lea.vmem [#allocation9], %s138
        %p140 = scmp.lt.s32.totalorder %s23, 1
        %s141 = scalar_select %p140, %s23, 1
        %s142 = sld [smem:[#allocation5 + %s141]]
        %s143 = sadd.s32 %s141, 2
        %s144 = sld [smem:[#allocation5 + %s143]]
        %v145 = vld [vmem:[%s121] sm:$0xff]
        %v146 = vld [vmem:[%s121 + $0x8] sm:$0xff]
        %v147 = vlaneseq
        %v148 = vshrl.u32 %v147, 7
        %v149 = vsub.s32 0, %v148
        %v150 = vrot.slane %v145, %v149
        %vm151 = vcmask 519168
        %152 = vst.msk [vmem:[#allocation2] sm:$0xf] %vm151, %v150
        %vm153 = vcmask 523264
        %154 = vst.msk [vmem:[#allocation2 + $0x4] sm:$0xff] %vm153, %v145
        %155 = vst.msk [vmem:[#allocation2 + $0xc] sm:$0xff] %vm153, %v146
        %v156 = vlaneseq
        %v157 = vshrl.u32 %v156, 7
        %v158 = vsub.s32 7, %v157
        %v159 = vrot.slane %v146, %v158
        %160 = vst.msk [vmem:[#allocation2 + $0x14] sm:$0xf] %vm151, %v159
        %s161 = scalar_lea.vmem [#allocation2], %s144
        %v162 = vld [vmem:[%s161] sm:$0xff]
        %v163 = vld [vmem:[%s161 + $0x8] sm:$0xff]
        %166 = vrot.lane.b32.xlu0 %v162, 16
        %v167 = vpop.permute.xlu0 %166
        %168 = vrot.lane.b32.xlu0 %v163, 16
        %v169 = vpop.permute.xlu0 %168
        %vm172 = vcmask 654464
        %173 = vst.msk [vmem:[#allocation3] sm:$0xff] %vm172, %v167
        %174 = vst.msk [vmem:[#allocation3 + $0x8] sm:$0xff] %vm172, %v169
        %vm175 = vcmask 31744
        %176 = vst.msk [vmem:[#allocation3] sm:$0xff] %vm175, %v162
        %177 = vst.msk [vmem:[#allocation3 + $0x8] sm:$0xff] %vm175, %v163
        %178 = vrot.lane.b32.xlu0 %v162, 20
        %v179 = vpop.permute.xlu0 %178
        %180 = vrot.lane.b32.xlu0 %v163, 20
        %v181 = vpop.permute.xlu0 %180
        %vm184 = vcmask 687744
        %185 = vst.msk [vmem:[#allocation3] sm:$0xff] %vm184, %v179
        %186 = vst.msk [vmem:[#allocation3 + $0x8] sm:$0xff] %vm184, %v181
        %187 = vrot.lane.b32.xlu0 %v162, 4
        %v188 = vpop.permute.xlu0 %187
        %189 = vrot.lane.b32.xlu0 %v163, 4
        %v190 = vpop.permute.xlu0 %189
        %vm193 = vcmask 64544
        %194 = vst.msk [vmem:[#allocation3] sm:$0xff] %vm193, %v188
        %195 = vst.msk [vmem:[#allocation3 + $0x8] sm:$0xff] %vm193, %v190
        %196 = vrot.lane.b32.xlu0 %v162, 24
        %v197 = vpop.permute.xlu0 %196
        %198 = vrot.lane.b32.xlu0 %v163, 24
        %v199 = vpop.permute.xlu0 %198
        %vm202 = vcmask 720544
        %203 = vst.msk [vmem:[#allocation3] sm:$0xff] %vm202, %v197
        %204 = vst.msk [vmem:[#allocation3 + $0x8] sm:$0xff] %vm202, %v199
        %205 = vrot.lane.b32.xlu0 %v162, 8
        %v206 = vpop.permute.xlu0 %205
        %207 = vrot.lane.b32.xlu0 %v163, 8
        %v208 = vpop.permute.xlu0 %207
        %vm211 = vcmask 97344
        %212 = vst.msk [vmem:[#allocation3] sm:$0xff] %vm211, %v206
        %213 = vst.msk [vmem:[#allocation3 + $0x8] sm:$0xff] %vm211, %v208
        %214 = vrot.lane.b32.xlu0 %v162, 28
        %v215 = vpop.permute.xlu0 %214
        %216 = vrot.lane.b32.xlu0 %v163, 28
        %v217 = vpop.permute.xlu0 %216
        %vm220 = vcmask 753344
        %221 = vst.msk [vmem:[#allocation3] sm:$0xff] %vm220, %v215
        %222 = vst.msk [vmem:[#allocation3 + $0x8] sm:$0xff] %vm220, %v217
        %223 = vrot.lane.b32.xlu0 %v162, 12
        %v224 = vpop.permute.xlu0 %223
        %225 = vrot.lane.b32.xlu0 %v163, 12
        %v226 = vpop.permute.xlu0 %225
        %vm229 = vcmask 130144
        %230 = vst.msk [vmem:[#allocation3] sm:$0xff] %vm229, %v224
        %231 = vst.msk [vmem:[#allocation3 + $0x8] sm:$0xff] %vm229, %v226
        %232 = vrot.lane.b32.xlu0 %v162, 32
        %v233 = vpop.permute.xlu0 %232
        %234 = vrot.lane.b32.xlu0 %v163, 32
        %v235 = vpop.permute.xlu0 %234
        %vm238 = vcmask 786144
        %239 = vst.msk [vmem:[#allocation3] sm:$0xff] %vm238, %v233
        %240 = vst.msk [vmem:[#allocation3 + $0x8] sm:$0xff] %vm238, %v235
        %v241 = vld [vmem:[#allocation3] sm:$0xff]
        %v242 = vld [vmem:[#allocation3 + $0x8] sm:$0xff]
        %p243 = scmp.eq.s32.totalorder %s142, 1
        %s244 = scalar_select %p243, 1, 0
        %v245 = vstv %s244
        %vm246 = vcmp.eq.s32.totalorder %v245, 1
        %249 = vrot.lane.b32.xlu0 %v241, 4
        %v250 = vpop.permute.xlu0 %249
        %251 = vrot.lane.b32.xlu0 %v242, 4
        %v252 = vpop.permute.xlu0 %251
        %v255 = vsel %vm246, %v241, %v250
        %v256 = vsel %vm246, %v242, %v252
        %p257 = scmp.eq.s32.totalorder %s142, 2
        %s258 = scalar_select %p257, 1, 0
        %v259 = vstv %s258
        %vm260 = vcmp.eq.s32.totalorder %v259, 1
        %263 = vrot.lane.b32.xlu0 %v255, 4
        %v264 = vpop.permute.xlu0 %263
        %265 = vrot.lane.b32.xlu0 %v256, 4
        %v266 = vpop.permute.xlu0 %265
        %v269 = vsel %vm260, %v241, %v264
        %v270 = vsel %vm260, %v242, %v266
        %p271 = scmp.eq.s32.totalorder %s142, 3
        %s272 = scalar_select %p271, 1, 0
        %v273 = vstv %s272
        %vm274 = vcmp.eq.s32.totalorder %v273, 1
        %277 = vrot.lane.b32.xlu0 %v269, 4
        %v278 = vpop.permute.xlu0 %277
        %279 = vrot.lane.b32.xlu0 %v270, 4
        %v280 = vpop.permute.xlu0 %279
        %v283 = vsel %vm274, %v241, %v278
        %v284 = vsel %vm274, %v242, %v280
        %p285 = scmp.eq.s32.totalorder %s142, 4
        %s286 = scalar_select %p285, 1, 0
        %v287 = vstv %s286
        %vm288 = vcmp.eq.s32.totalorder %v287, 1
        %291 = vrot.lane.b32.xlu0 %v283, 4
        %v292 = vpop.permute.xlu0 %291
        %293 = vrot.lane.b32.xlu0 %v284, 4
        %v294 = vpop.permute.xlu0 %293
        %v297 = vsel %vm288, %v241, %v292
        %v298 = vsel %vm288, %v242, %v294
        %p299 = scmp.eq.s32.totalorder %s142, 5
        %s300 = scalar_select %p299, 1, 0
        %v301 = vstv %s300
        %vm302 = vcmp.eq.s32.totalorder %v301, 1
        %305 = vrot.lane.b32.xlu0 %v297, 4
        %v306 = vpop.permute.xlu0 %305
        %307 = vrot.lane.b32.xlu0 %v298, 4
        %v308 = vpop.permute.xlu0 %307
        %v311 = vsel %vm302, %v241, %v306
        %v312 = vsel %vm302, %v242, %v308
        %p313 = scmp.eq.s32.totalorder %s142, 6
        %s314 = scalar_select %p313, 1, 0
        %v315 = vstv %s314
        %vm316 = vcmp.eq.s32.totalorder %v315, 1
        %319 = vrot.lane.b32.xlu0 %v311, 4
        %v320 = vpop.permute.xlu0 %319
        %321 = vrot.lane.b32.xlu0 %v312, 4
        %v322 = vpop.permute.xlu0 %321
        %v325 = vsel %vm316, %v241, %v320
        %v326 = vsel %vm316, %v242, %v322
        %p327 = scmp.eq.s32.totalorder %s142, 7
        %s328 = scalar_select %p327, 1, 0
        %v329 = vstv %s328
        %vm330 = vcmp.eq.s32.totalorder %v329, 1
        %333 = vrot.lane.b32.xlu0 %v325, 4
        %v334 = vpop.permute.xlu0 %333
        %335 = vrot.lane.b32.xlu0 %v326, 4
        %v336 = vpop.permute.xlu0 %335
        %v339 = vsel %vm330, %v241, %v334
        %v340 = vsel %vm330, %v242, %v336
        %p341 = scmp.eq.s32.totalorder %s142, 8
        %s342 = scalar_select %p341, 1, 0
        %v343 = vstv %s342
        %vm344 = vcmp.eq.s32.totalorder %v343, 1
        %347 = vrot.lane.b32.xlu0 %v339, 4
        %v348 = vpop.permute.xlu0 %347
        %349 = vrot.lane.b32.xlu0 %v340, 4
        %v350 = vpop.permute.xlu0 %349
        %v353 = vsel %vm344, %v241, %v348
        %v354 = vsel %vm344, %v242, %v350
        %357 = vrot.lane.b32.xlu0 %v353, 96
        %v358 = vpop.permute.xlu0 %357
        %359 = vrot.lane.b32.xlu0 %v354, 96
        %v360 = vpop.permute.xlu0 %359
        %363 = vst.msk [vmem:[%s139] sm:$0xff] %vm153, %v358
        %364 = vst.msk [vmem:[%s139 + $0x8] sm:$0xff] %vm153, %v360
        %s365 = sand.u32 %s57, 1
        %s366 = scalar_lea.sflag [#allocation8], %s365
        %s367 = sand.u32 %s57, 1
        %s368 = smul.addr %s367, 16
        %s369 = scalar_lea.vmem [#allocation9], %s368
        // Predicated region
        $region29: #{tpu_custom_call.1} parent=23 // pred_check
          %p370 = pneg %p67
        $region30: #{tpu_custom_call.1} parent=23 // pred_check_branch
          %372 = sbr.rel (%p370) target = $region32
        $region31: #{tpu_custom_call.1} parent=23 // pred_region
          %s374 = ssub.s32 256, 256
          %375 = vsyncadd %s366, %s374
          %s376 = smul.addr %s23, 2
          %s377 = smul.addr %s376, 128
          %s378 = scalar_lea.hbm %s2, %s377
          %s379 = sshll.u32 %s369, 4
          %s380 = int_to_ptr.vmem [resolvable:$true] %s379
          %385 = dma.vmem_to_hbm [thread:$0]  %s380, 256, %s378, %s366, 128, 128, 8
        $region32: #{tpu_custom_call.1} parent=23 // pred_fallthru
          _
      $region24: #{tpu_custom_call.1} parent=5 // pred_fallthru
        _
      %p386 = scmp.le.s32.totalorder 2, %s18
      // Predicated region
      $region33: #{tpu_custom_call.1} parent=5 // pred_check
        %p387 = pneg %p386
      $region34: #{tpu_custom_call.1} parent=5 // pred_check_branch
        %389 = sbr.rel (%p387) target = $region36
      $region35: #{tpu_custom_call.1} parent=5 // pred_region
        %s390 = ssub.s32 %s18, 2
        // Predicated region
        $region37: #{tpu_custom_call.1} parent=35 // pred_check
          %p391 = pneg %p73
        $region38: #{tpu_custom_call.1} parent=35 // pred_check_branch
          %393 = sbr.rel (%p391) target = $region40
        $region39: #{tpu_custom_call.1} parent=35 // pred_region
          %s394 = sand.u32 %s58, 1
          %s395 = scalar_lea.sflag [#allocation8], %s394
          %s396 = sand.u32 %s58, 1
          %s397 = smul.addr %s396, 16
          %s398 = scalar_lea.vmem [#allocation9], %s397
          %399 = dma.done %s395, 256
        $region40: #{tpu_custom_call.1} parent=35 // pred_fallthru
          _
      $region36: #{tpu_custom_call.1} parent=5 // pred_fallthru
        _
    $region6: #{tpu_custom_call.1} parent=1 // loop_footer
      %s22 = sadd.s32 1, %s18
    $region7: #{tpu_custom_call.1} parent=1 // loop_footer_branch
      %17 = sbr.rel target = $region3
    $region8: #{tpu_custom_call.1} parent=1 // loop_exit
      _
    %400 = vsyncpa [#allocation7], 1
    %s401 = scalar_lea.sflag [#allocation7], 1
    %402 = vsyncpa %s401, 1
    %403 = vsyncpa [#allocation8], 1
    %s404 = scalar_lea.sflag [#allocation8], 1
    %405 = vsyncpa %s404, 1

</llo_original>
